<compile_context>
chip_gen: v5e
topology: v5e:2x2
jax: 0.10.0
libtpu: 0.0.40
codegen_flags: <defaults>
</compile_context>

<pallas_src>
import functools

import jax
import jax.numpy as jnp
from jax.experimental import pallas as pl
from jax.experimental.pallas import tpu as pltpu


def _round_up(x, m):
    return ((x + m - 1) // m) * m


def _num_tensorcores():
    # v7x exposes 2 TensorCores per chip; v5e/v6e have 1.  Fall back to 1 if
    # the attribute is unavailable.
    try:
        return max(1, int(getattr(jax.devices()[0], "num_cores", 1)))
    except Exception:
        return 1


def critic_mlp_kernel(x_ref, w1_ref, b1_ref, w2_ref, b2_ref, w3_ref, b3_ref,
                      o_ref):
    """Fused 3-layer MLP, feature-major: activations are (features, batch)."""
    w1 = w1_ref[...]                       # (H1, S+A)  nn.Linear (out, in) layout
    w2 = w2_ref[...]                       # (H2, H1)
    w3 = w3_ref[...]                       # (1,  H2)

    # Single concatenated input tile, batch on lanes.  Cast to the weight
    # dtype only at the MXU boundary (bf16 fast path); accumulate in f32.
    x = x_ref[...].astype(w1.dtype)        # (S+A, bb)

    # Layer 1: h1^T = W1 @ x^T + b1  -- one K=(S+A) MXU pass (concat folded).
    h = jnp.dot(w1, x, preferred_element_type=jnp.float32) + b1_ref[...]
    h = jnp.maximum(h, 0.0).astype(w2.dtype)        # f32 ReLU on the VPU

    # Layer 2: h2^T = W2 @ h1^T + b2.
    h = jnp.dot(w2, h, preferred_element_type=jnp.float32) + b2_ref[...]
    h = jnp.maximum(h, 0.0).astype(w3.dtype)

    # Layer 3: q = w3 @ h2^T + b3  -> (1, bb): lane-dense unmasked store.
    q = jnp.dot(w3, h, preferred_element_type=jnp.float32) + b3_ref[...]
    o_ref[...] = q.astype(o_ref.dtype)


@functools.partial(jax.jit, static_argnames=("block_b",))
def critic_forward(state, action, params, *, block_b=None):
    """Q(s, a) via a single fused Pallas kernel.

    block_b=None picks one batch tile per TensorCore (clamped only by VMEM),
    minimizing per-grid-step pipeline overhead.
    """
    w1, b1 = params["w1"], params["b1"]
    w2, b2 = params["w2"], params["b2"]
    w3, b3 = params["w3"], params["b3"]

    B, S = state.shape
    _, A = action.shape
    D = S + A
    H1 = w1.shape[0]
    H2 = w2.shape[0]

    # Batch-tile size: as big as VMEM allows; grid steps ~= TensorCore count.
    # The two f32 hidden activations ((H1+H2) rows x bb lanes) dominate VMEM;
    # the cap keeps them under ~8 MiB, far below even v7x's budget.
    bb_cap = max(128, min(4096, (8 << 20) // (4 * max(H1 + H2, 1))))
    if block_b is None:
        bb = _round_up(pl.cdiv(B, _num_tensorcores()), 128)
    else:
        bb = _round_up(block_b, 128)
    bb = min(bb, _round_up(B, 128), _round_up(bb_cap, 128))
    nb = pl.cdiv(B, bb)
    b_pad = nb * bb

    # Single feature-major input: the concat is folded here (one wide
    # lane-dense DMA; one K=S+A matmul in the kernel).
    x_t = jnp.concatenate([state.T, action.T], axis=0)        # (S+A, B)
    if b_pad > B:
        x_t = jnp.pad(x_t, ((0, 0), (0, b_pad - B)))          # zero-pad tail

    const = lambda arr: pl.BlockSpec(arr.shape, lambda i: (0, 0))

    flops = 2 * b_pad * (D * H1 + H1 * H2 + H2)
    bytes_accessed = (
        int(x_t.size) * x_t.dtype.itemsize
        + sum(int(p.size) * p.dtype.itemsize
              for p in (w1, b1, w2, b2, w3, b3))
        + b_pad * 4)

    out = pl.pallas_call(
        critic_mlp_kernel,
        out_shape=jax.ShapeDtypeStruct((1, b_pad), jnp.float32),
        grid_spec=pltpu.PrefetchScalarGridSpec(
            num_scalar_prefetch=0,
            grid=(nb,),
            in_specs=[
                pl.BlockSpec((D, bb), lambda i: (0, i)),   # lane-dense input tile
                const(w1), const(b1),
                const(w2), const(b2),
                const(w3), const(b3),
            ],
            out_specs=pl.BlockSpec((1, bb), lambda i: (0, i)),
        ),
        compiler_params=pltpu.CompilerParams(
            dimension_semantics=("parallel",)),
        cost_estimate=pl.CostEstimate(
            flops=flops, transcendentals=0, bytes_accessed=bytes_accessed),
    )(x_t, w1, b1, w2, b2, w3, b3)

    # (1, b_pad) lane-dense slab -> (B, 1) column (padded tail sliced off).
    return out[0, :B].reshape(B, 1)


def init_critic_params(key, state_dim, action_dim, hidden_dims,
                       dtype=jnp.float32):
    """Xavier-uniform weights in nn.Linear (out, in) layout, zero f32 biases."""
    assert len(hidden_dims) == 2, "fused kernel implements the 2-hidden-layer config"
    H1, H2 = hidden_dims
    k1, k2, k3 = jax.random.split(key, 3)

    def xavier(k, fan_in, fan_out):
        bound = (6.0 / (fan_in + fan_out)) ** 0.5
        return jax.random.uniform(k, (fan_out, fan_in), jnp.float32,
                                  minval=-bound, maxval=bound)

    return {
        "w1": xavier(k1, state_dim + action_dim, H1).astype(dtype),  # (H1, S+A)
        "b1": jnp.zeros((H1, 1), jnp.float32),
        "w2": xavier(k2, H1, H2).astype(dtype),                      # (H2, H1)
        "b2": jnp.zeros((H2, 1), jnp.float32),
        "w3": xavier(k3, H2, 1).astype(dtype),                       # (1, H2)
        "b3": jnp.zeros((1, 1), jnp.float32),
    }


def critic_reference(state, action, params):
    """Pure-JAX reference with identical casting / accumulation structure."""
    w1, b1 = params["w1"], params["b1"]
    w2, b2 = params["w2"], params["b2"]
    w3, b3 = params["w3"], params["b3"]
    x = jnp.concatenate([state, action], axis=1).astype(w1.dtype)
    h = jnp.dot(x, w1.T, preferred_element_type=jnp.float32) + b1.T
    h = jnp.maximum(h, 0.0).astype(w2.dtype)
    h = jnp.dot(h, w2.T, preferred_element_type=jnp.float32) + b2.T
    h = jnp.maximum(h, 0.0).astype(w3.dtype)
    return jnp.dot(h, w3.T, preferred_element_type=jnp.float32) + b3.T


if __name__ == "__main__":
    key = jax.random.PRNGKey(0)
    k_s, k_a, k_p = jax.random.split(key, 3)

    batch = 256
    state_dim = 12
    action_dim = 4
    hidden_dims = (256, 256)   # PyTorch default config; fills the 256-wide v6e/v7x MXU

    state = jax.random.normal(k_s, (batch, state_dim), jnp.float32)
    action = jax.random.normal(k_a, (batch, action_dim), jnp.float32)

    # float32 path (strict numerical check), auto tile => grid steps = TC count.
    params = init_critic_params(k_p, state_dim, action_dim, hidden_dims)
    q = jax.block_until_ready(critic_forward(state, action, params))
    q_ref = critic_reference(state, action, params)
    assert q.shape == (batch, 1)
    assert jnp.allclose(q, q_ref, atol=1e-4, rtol=1e-4), "f32 mismatch vs reference"

    # Ragged batch (padding path) + explicit 2-step grid (v7x both-TC shape).
    q2 = jax.block_until_ready(
        critic_forward(state[:200], action[:200], params, block_b=128))
    assert q2.shape == (200, 1)
    assert jnp.allclose(q2, q_ref[:200], atol=1e-4, rtol=1e-4), "tiled/padded mismatch"

    # bf16 operands with f32 accumulation (v6e / v7x MXU fast path).
    params16 = init_critic_params(k_p, state_dim, action_dim, hidden_dims,
                                  dtype=jnp.bfloat16)
    s16 = state.astype(jnp.bfloat16)
    a16 = action.astype(jnp.bfloat16)
    q16 = jax.block_until_ready(critic_forward(s16, a16, params16))
    q16_ref = critic_reference(s16, a16, params16)
    assert q16.shape == (batch, 1)
    assert jnp.allclose(q16, q16_ref, atol=2e-2, rtol=2e-2), "bf16 mismatch vs reference"

    print("KERNEL_OK")
</pallas_src>

<mosaic_0001>
module attributes {stable_mosaic.version = 11 : i64} {
  func.func @critic_mlp_kernel(%arg0: i32, %arg1: memref<16x256xf32, #tpu.memory_space<vmem>>, %arg2: memref<256x16xf32, #tpu.memory_space<vmem>>, %arg3: memref<256x1xf32, #tpu.memory_space<vmem>>, %arg4: memref<256x256xf32, #tpu.memory_space<vmem>>, %arg5: memref<256x1xf32, #tpu.memory_space<vmem>>, %arg6: memref<1x256xf32, #tpu.memory_space<vmem>>, %arg7: memref<1x1xf32, #tpu.memory_space<vmem>>, %arg8: memref<1x256xf32, #tpu.memory_space<vmem>>) attributes {dimension_semantics = [#tpu.dimension_semantics<parallel>], iteration_bounds = array<i64: 1>, scalar_prefetch = 0 : i64, scratch_operands = 0 : i64, tpu.core_type = #tpu.core_type<tc>, window_params = [{transform_indices = @transform_0, window_bounds = array<i64: 16, 256>}, {pipeline_mode = #tpu.pipeline_mode<synchronous>, transform_indices = @transform_1, window_bounds = array<i64: 256, 16>}, {pipeline_mode = #tpu.pipeline_mode<synchronous>, transform_indices = @transform_2, window_bounds = array<i64: 256, 1>}, {pipeline_mode = #tpu.pipeline_mode<synchronous>, transform_indices = @transform_3, window_bounds = array<i64: 256, 256>}, {pipeline_mode = #tpu.pipeline_mode<synchronous>, transform_indices = @transform_4, window_bounds = array<i64: 256, 1>}, {pipeline_mode = #tpu.pipeline_mode<synchronous>, transform_indices = @transform_5, window_bounds = array<i64: 1, 256>}, {pipeline_mode = #tpu.pipeline_mode<synchronous>, transform_indices = @transform_6, window_bounds = array<i64: 1, 1>}, {transform_indices = @transform_7, window_bounds = array<i64: 1, 256>}]} {
    %c0 = arith.constant 0 : index
    %c0_0 = arith.constant 0 : index
    %0 = vector.load %arg2[%c0, %c0_0] : memref<256x16xf32, #tpu.memory_space<vmem>>, vector<256x16xf32>
    %c0_1 = arith.constant 0 : index
    %c0_2 = arith.constant 0 : index
    %1 = vector.load %arg4[%c0_1, %c0_2] : memref<256x256xf32, #tpu.memory_space<vmem>>, vector<256x256xf32>
    %c0_3 = arith.constant 0 : index
    %c0_4 = arith.constant 0 : index
    %2 = vector.load %arg6[%c0_3, %c0_4] : memref<1x256xf32, #tpu.memory_space<vmem>>, vector<1x256xf32>
    %c0_5 = arith.constant 0 : index
    %c0_6 = arith.constant 0 : index
    %3 = vector.load %arg1[%c0_5, %c0_6] : memref<16x256xf32, #tpu.memory_space<vmem>>, vector<16x256xf32>
    %cst = arith.constant dense<0.000000e+00> : vector<256x256xf32>
    %4 = tpu.matmul %0, %3, %cst {dimension_numbers = #tpu.dot_dimension_numbers<[1], [0], [0], [1], [0, 0, 1, 1], [], []>} : vector<256x16xf32>, vector<16x256xf32>, vector<256x256xf32> -> vector<256x256xf32>
    %c0_7 = arith.constant 0 : index
    %c0_8 = arith.constant 0 : index
    %5 = vector.load %arg3[%c0_7, %c0_8] : memref<256x1xf32, #tpu.memory_space<vmem>>, vector<256x1xf32>
    %6 = vector.broadcast %5 : vector<256x1xf32> to vector<256x256xf32>
    %7 = arith.addf %4, %6 : vector<256x256xf32>
    %cst_9 = arith.constant 0.000000e+00 : f32
    %8 = vector.broadcast %cst_9 : f32 to vector<256x256xf32>
    %9 = arith.maximumf %7, %8 : vector<256x256xf32>
    %cst_10 = arith.constant dense<0.000000e+00> : vector<256x256xf32>
    %10 = tpu.matmul %1, %9, %cst_10 {dimension_numbers = #tpu.dot_dimension_numbers<[1], [0], [0], [1], [0, 0, 1, 1], [], []>} : vector<256x256xf32>, vector<256x256xf32>, vector<256x256xf32> -> vector<256x256xf32>
    %c0_11 = arith.constant 0 : index
    %c0_12 = arith.constant 0 : index
    %11 = vector.load %arg5[%c0_11, %c0_12] : memref<256x1xf32, #tpu.memory_space<vmem>>, vector<256x1xf32>
    %12 = vector.broadcast %11 : vector<256x1xf32> to vector<256x256xf32>
    %13 = arith.addf %10, %12 : vector<256x256xf32>
    %cst_13 = arith.constant 0.000000e+00 : f32
    %14 = vector.broadcast %cst_13 : f32 to vector<256x256xf32>
    %15 = arith.maximumf %13, %14 : vector<256x256xf32>
    %cst_14 = arith.constant dense<0.000000e+00> : vector<1x256xf32>
    %16 = tpu.matmul %2, %15, %cst_14 {dimension_numbers = #tpu.dot_dimension_numbers<[1], [0], [0], [1], [0, 0, 1, 1], [], []>} : vector<1x256xf32>, vector<256x256xf32>, vector<1x256xf32> -> vector<1x256xf32>
    %c0_15 = arith.constant 0 : index
    %c0_16 = arith.constant 0 : index
    %17 = vector.load %arg7[%c0_15, %c0_16] : memref<1x1xf32, #tpu.memory_space<vmem>>, vector<1x1xf32>
    %18 = vector.broadcast %17 : vector<1x1xf32> to vector<1x256xf32>
    %19 = arith.addf %16, %18 : vector<1x256xf32>
    %c0_17 = arith.constant 0 : index
    %c0_18 = arith.constant 0 : index
    %20 = vector.load %arg8[%c0_17, %c0_18] : memref<1x256xf32, #tpu.memory_space<vmem>>, vector<1x256xf32>
    tpu.vector_store %arg8[%c0_17, %c0_18], %19 {strides = array<i32>} : memref<1x256xf32, #tpu.memory_space<vmem>>, vector<1x256xf32>,
    return
  }
  func.func @transform_0(%arg0: i32) -> (i32, i32) {
    %c0_i32 = arith.constant 0 : i32
    %c0_i32_0 = arith.constant 0 : i32
    return %c0_i32, %arg0 : i32, i32
  }
  func.func @transform_1(%arg0: i32) -> (i32, i32) {
    %c0_i32 = arith.constant 0 : i32
    %c0_i32_0 = arith.constant 0 : i32
    %c0_i32_1 = arith.constant 0 : i32
    return %c0_i32, %c0_i32_0 : i32, i32
  }
  func.func @transform_2(%arg0: i32) -> (i32, i32) {
    %c0_i32 = arith.constant 0 : i32
    %c0_i32_0 = arith.constant 0 : i32
    %c0_i32_1 = arith.constant 0 : i32
    return %c0_i32, %c0_i32_0 : i32, i32
  }
  func.func @transform_3(%arg0: i32) -> (i32, i32) {
    %c0_i32 = arith.constant 0 : i32
    %c0_i32_0 = arith.constant 0 : i32
    %c0_i32_1 = arith.constant 0 : i32
    return %c0_i32, %c0_i32_0 : i32, i32
  }
  func.func @transform_4(%arg0: i32) -> (i32, i32) {
    %c0_i32 = arith.constant 0 : i32
    %c0_i32_0 = arith.constant 0 : i32
    %c0_i32_1 = arith.constant 0 : i32
    return %c0_i32, %c0_i32_0 : i32, i32
  }
  func.func @transform_5(%arg0: i32) -> (i32, i32) {
    %c0_i32 = arith.constant 0 : i32
    %c0_i32_0 = arith.constant 0 : i32
    %c0_i32_1 = arith.constant 0 : i32
    return %c0_i32, %c0_i32_0 : i32, i32
  }
  func.func @transform_6(%arg0: i32) -> (i32, i32) {
    %c0_i32 = arith.constant 0 : i32
    %c0_i32_0 = arith.constant 0 : i32
    %c0_i32_1 = arith.constant 0 : i32
    return %c0_i32, %c0_i32_0 : i32, i32
  }
  func.func @transform_7(%arg0: i32) -> (i32, i32) {
    %c0_i32 = arith.constant 0 : i32
    %c0_i32_0 = arith.constant 0 : i32
    return %c0_i32, %arg0 : i32, i32
  }
}

</mosaic_0001>

<llo_original>
// kernel: critic_forward.1
$region0: #{critic_forward.1}
  #allocation0 [shape = 'u32[]', space=smem, size = 0x4, offset = 0x4, fixed_abs, tag = 'smem constant byte address 0x4 - core index']
  #allocation1 [shape = 'u32[72,128]{1,0:T(1,128)}', space=vmem, size = 0x9000, scoped, tag = 'internal scratch']
  #allocation2 [shape = 'f32[1,1]{1,0:T(1,128)S(1)}', space=vmem, size = 0x200, scoped, tag = 'scoped memory for critic_forward.1']
  %s0 = inlined_call_operand.vmem [shape: f32[16,256], index: 0, kind: input, shape index: {}]
  %s1 = inlined_call_operand.vmem [shape: f32[256,16], index: 1, kind: input, shape index: {}]
  %s2 = inlined_call_operand.vmem [shape: f32[256,1], index: 2, kind: input, shape index: {}]
  %s3 = inlined_call_operand.vmem [shape: f32[256,256], index: 3, kind: input, shape index: {}]
  %s4 = inlined_call_operand.vmem [shape: f32[256,1], index: 4, kind: input, shape index: {}]
  %s5 = inlined_call_operand.vmem [shape: f32[1,256], index: 5, kind: input, shape index: {}]
  %s6 = inlined_call_operand.<no memory space> [shape: f32[1,1], index: 6, kind: input, shape index: {}]
  %s7 = inlined_call_operand.hbm [shape: f32[1,256], index: 7, kind: output, shape index: {}]
  %s8 = sld [smem:[#allocation0]]
  $region38: #{critic_forward.1} parent=0
    _
  %s10 = ssub.s32 1, %s8
  %s11 = scalar_select 0, %s10, %s8
  %v12 = vstv %s6
  %13 = vst [vmem:[#allocation2] sm:$0x1] %v12
  $region1: #{critic_forward.1} parent=0
    #allocation3 [shape = 'u8[1024]{0}', space=vmem, size = 0x400, scoped, tag = 'output window, operand 0, single buffered']
    #allocation4 [shape = 's32[1]{0}', space=sflag, size = 0x4, scoped, tag = 'scoped memory for critic_forward.1']
    %14 = vsyncpa [#allocation4], 0
    // Predicated region
    $region2: #{critic_forward.1} parent=1 // pred_check
      _
    $region3: #{critic_forward.1} parent=1 // pred_check_branch
      %16 = sbr.rel (0) target = $region5
    $region4: #{critic_forward.1} parent=1 // pred_region
      _
    $region5: #{critic_forward.1} parent=1 // pred_fallthru
      _
    // Predicated region
    $region6: #{critic_forward.1} parent=1 // pred_check
      _
    $region7: #{critic_forward.1} parent=1 // pred_check_branch
      %18 = sbr.rel (0) target = $region9
    $region8: #{critic_forward.1} parent=1 // pred_region
      _
    $region9: #{critic_forward.1} parent=1 // pred_fallthru
      _
    // Predicated region
    $region10: #{critic_forward.1} parent=1 // pred_check
      _
    $region11: #{critic_forward.1} parent=1 // pred_check_branch
      %20 = sbr.rel (0) target = $region13
    $region12: #{critic_forward.1} parent=1 // pred_region
      _
    $region13: #{critic_forward.1} parent=1 // pred_fallthru
      _
    // Predicated region
    $region14: #{critic_forward.1} parent=1 // pred_check
      _
    $region15: #{critic_forward.1} parent=1 // pred_check_branch
      %22 = sbr.rel (0) target = $region17
    $region16: #{critic_forward.1} parent=1 // pred_region
      _
    $region17: #{critic_forward.1} parent=1 // pred_fallthru
      _
    // Predicated region
    $region18: #{critic_forward.1} parent=1 // pred_check
      _
    $region19: #{critic_forward.1} parent=1 // pred_check_branch
      %24 = sbr.rel (0) target = $region21
    $region20: #{critic_forward.1} parent=1 // pred_region
      _
    $region21: #{critic_forward.1} parent=1 // pred_fallthru
      _
    // Predicated region
    $region22: #{critic_forward.1} parent=1 // pred_check
      _
    $region23: #{critic_forward.1} parent=1 // pred_check_branch
      %26 = sbr.rel (0) target = $region25
    $region24: #{critic_forward.1} parent=1 // pred_region
      _
    $region25: #{critic_forward.1} parent=1 // pred_fallthru
      _
    // Predicated region
    $region26: #{critic_forward.1} parent=1 // pred_check
      _
    $region27: #{critic_forward.1} parent=1 // pred_check_branch
      %28 = sbr.rel (0) target = $region29
    $region28: #{critic_forward.1} parent=1 // pred_region
      _
    $region29: #{critic_forward.1} parent=1 // pred_fallthru
      _
    %v29 = vld [vmem:[%s1] sm:$0xff]
    %v30 = vld [vmem:[%s1 + $0x8] sm:$0xff]
    %v31 = vld [vmem:[%s1 + $0x10] sm:$0xff]
    %v32 = vld [vmem:[%s1 + $0x18] sm:$0xff]
    %v33 = vld [vmem:[%s1 + $0x20] sm:$0xff]
    %v34 = vld [vmem:[%s1 + $0x28] sm:$0xff]
    %v35 = vld [vmem:[%s1 + $0x30] sm:$0xff]
    %v36 = vld [vmem:[%s1 + $0x38] sm:$0xff]
    %v37 = vld [vmem:[%s1 + $0x40] sm:$0xff]
    %v38 = vld [vmem:[%s1 + $0x48] sm:$0xff]
    %v39 = vld [vmem:[%s1 + $0x50] sm:$0xff]
    %v40 = vld [vmem:[%s1 + $0x58] sm:$0xff]
    %v41 = vld [vmem:[%s1 + $0x60] sm:$0xff]
    %v42 = vld [vmem:[%s1 + $0x68] sm:$0xff]
    %v43 = vld [vmem:[%s1 + $0x70] sm:$0xff]
    %v44 = vld [vmem:[%s1 + $0x78] sm:$0xff]
    %v45 = vld [vmem:[%s1 + $0x80] sm:$0xff]
    %v46 = vld [vmem:[%s1 + $0x88] sm:$0xff]
    %v47 = vld [vmem:[%s1 + $0x90] sm:$0xff]
    %v48 = vld [vmem:[%s1 + $0x98] sm:$0xff]
    %v49 = vld [vmem:[%s1 + $0xa0] sm:$0xff]
    %v50 = vld [vmem:[%s1 + $0xa8] sm:$0xff]
    %v51 = vld [vmem:[%s1 + $0xb0] sm:$0xff]
    %v52 = vld [vmem:[%s1 + $0xb8] sm:$0xff]
    %v53 = vld [vmem:[%s1 + $0xc0] sm:$0xff]
    %v54 = vld [vmem:[%s1 + $0xc8] sm:$0xff]
    %v55 = vld [vmem:[%s1 + $0xd0] sm:$0xff]
    %v56 = vld [vmem:[%s1 + $0xd8] sm:$0xff]
    %v57 = vld [vmem:[%s1 + $0xe0] sm:$0xff]
    %v58 = vld [vmem:[%s1 + $0xe8] sm:$0xff]
    %v59 = vld [vmem:[%s1 + $0xf0] sm:$0xff]
    %v60 = vld [vmem:[%s1 + $0xf8] sm:$0xff]
    %v61 = vld [vmem:[%s3] sm:$0xff]
    %v62 = vld [vmem:[%s3 + $0x8] sm:$0xff]
    %v63 = vld [vmem:[%s3 + $0x10] sm:$0xff]
    %v64 = vld [vmem:[%s3 + $0x18] sm:$0xff]
    %v65 = vld [vmem:[%s3 + $0x20] sm:$0xff]
    %v66 = vld [vmem:[%s3 + $0x28] sm:$0xff]
    %v67 = vld [vmem:[%s3 + $0x30] sm:$0xff]
    %v68 = vld [vmem:[%s3 + $0x38] sm:$0xff]
    %v69 = vld [vmem:[%s3 + $0x40] sm:$0xff]
    %v70 = vld [vmem:[%s3 + $0x48] sm:$0xff]
    %v71 = vld [vmem:[%s3 + $0x50] sm:$0xff]
    %v72 = vld [vmem:[%s3 + $0x58] sm:$0xff]
    %v73 = vld [vmem:[%s3 + $0x60] sm:$0xff]
    %v74 = vld [vmem:[%s3 + $0x68] sm:$0xff]
    %v75 = vld [vmem:[%s3 + $0x70] sm:$0xff]
    %v76 = vld [vmem:[%s3 + $0x78] sm:$0xff]
    %v77 = vld [vmem:[%s3 + $0x80] sm:$0xff]
    %v78 = vld [vmem:[%s3 + $0x88] sm:$0xff]
    %v79 = vld [vmem:[%s3 + $0x90] sm:$0xff]
    %v80 = vld [vmem:[%s3 + $0x98] sm:$0xff]
    %v81 = vld [vmem:[%s3 + $0xa0] sm:$0xff]
    %v82 = vld [vmem:[%s3 + $0xa8] sm:$0xff]
    %v83 = vld [vmem:[%s3 + $0xb0] sm:$0xff]
    %v84 = vld [vmem:[%s3 + $0xb8] sm:$0xff]
    %v85 = vld [vmem:[%s3 + $0xc0] sm:$0xff]
    %v86 = vld [vmem:[%s3 + $0xc8] sm:$0xff]
    %v87 = vld [vmem:[%s3 + $0xd0] sm:$0xff]
    %v88 = vld [vmem:[%s3 + $0xd8] sm:$0xff]
    %v89 = vld [vmem:[%s3 + $0xe0] sm:$0xff]
    %v90 = vld [vmem:[%s3 + $0xe8] sm:$0xff]
    %v91 = vld [vmem:[%s3 + $0xf0] sm:$0xff]
    %v92 = vld [vmem:[%s3 + $0xf8] sm:$0xff]
    %v93 = vld [vmem:[%s3 + $0x100] sm:$0xff]
    %v94 = vld [vmem:[%s3 + $0x108] sm:$0xff]
    %v95 = vld [vmem:[%s3 + $0x110] sm:$0xff]
    %v96 = vld [vmem:[%s3 + $0x118] sm:$0xff]
    %v97 = vld [vmem:[%s3 + $0x120] sm:$0xff]
    %v98 = vld [vmem:[%s3 + $0x128] sm:$0xff]
    %v99 = vld [vmem:[%s3 + $0x130] sm:$0xff]
    %v100 = vld [vmem:[%s3 + $0x138] sm:$0xff]
    %v101 = vld [vmem:[%s3 + $0x140] sm:$0xff]
    %v102 = vld [vmem:[%s3 + $0x148] sm:$0xff]
    %v103 = vld [vmem:[%s3 + $0x150] sm:$0xff]
    %v104 = vld [vmem:[%s3 + $0x158] sm:$0xff]
    %v105 = vld [vmem:[%s3 + $0x160] sm:$0xff]
    %v106 = vld [vmem:[%s3 + $0x168] sm:$0xff]
    %v107 = vld [vmem:[%s3 + $0x170] sm:$0xff]
    %v108 = vld [vmem:[%s3 + $0x178] sm:$0xff]
    %v109 = vld [vmem:[%s3 + $0x180] sm:$0xff]
    %v110 = vld [vmem:[%s3 + $0x188] sm:$0xff]
    %v111 = vld [vmem:[%s3 + $0x190] sm:$0xff]
    %v112 = vld [vmem:[%s3 + $0x198] sm:$0xff]
    %v113 = vld [vmem:[%s3 + $0x1a0] sm:$0xff]
    %v114 = vld [vmem:[%s3 + $0x1a8] sm:$0xff]
    %v115 = vld [vmem:[%s3 + $0x1b0] sm:$0xff]
    %v116 = vld [vmem:[%s3 + $0x1b8] sm:$0xff]
    %v117 = vld [vmem:[%s3 + $0x1c0] sm:$0xff]
    %v118 = vld [vmem:[%s3 + $0x1c8] sm:$0xff]
    %v119 = vld [vmem:[%s3 + $0x1d0] sm:$0xff]
    %v120 = vld [vmem:[%s3 + $0x1d8] sm:$0xff]
    %v121 = vld [vmem:[%s3 + $0x1e0] sm:$0xff]
    %v122 = vld [vmem:[%s3 + $0x1e8] sm:$0xff]
    %v123 = vld [vmem:[%s3 + $0x1f0] sm:$0xff]
    %v124 = vld [vmem:[%s3 + $0x1f8] sm:$0xff]
    %v125 = vld [vmem:[%s5] sm:$0x3]
    %v126 = vld [vmem:[%s0] sm:$0xff]
    %v127 = vld [vmem:[%s0 + $0x8] sm:$0xff]
    %v128 = vld [vmem:[%s0 + $0x10] sm:$0xff]
    %v129 = vld [vmem:[%s0 + $0x18] sm:$0xff]
    %v130 = vld [vmem:[%s2] sm:$0xff]
    %v131 = vld [vmem:[%s2 + $0x8] sm:$0xff]
    %v132 = vld [vmem:[%s2 + $0x10] sm:$0xff]
    %v133 = vld [vmem:[%s2 + $0x18] sm:$0xff]
    %v134 = vld [vmem:[%s2 + $0x20] sm:$0xff]
    %v135 = vld [vmem:[%s2 + $0x28] sm:$0xff]
    %v136 = vld [vmem:[%s2 + $0x30] sm:$0xff]
    %v137 = vld [vmem:[%s2 + $0x38] sm:$0xff]
    %v138 = vld [vmem:[%s2 + $0x40] sm:$0xff]
    %v139 = vld [vmem:[%s2 + $0x48] sm:$0xff]
    %v140 = vld [vmem:[%s2 + $0x50] sm:$0xff]
    %v141 = vld [vmem:[%s2 + $0x58] sm:$0xff]
    %v142 = vld [vmem:[%s2 + $0x60] sm:$0xff]
    %v143 = vld [vmem:[%s2 + $0x68] sm:$0xff]
    %v144 = vld [vmem:[%s2 + $0x70] sm:$0xff]
    %v145 = vld [vmem:[%s2 + $0x78] sm:$0xff]
    %v146 = vld [vmem:[%s2 + $0x80] sm:$0xff]
    %v147 = vld [vmem:[%s2 + $0x88] sm:$0xff]
    %v148 = vld [vmem:[%s2 + $0x90] sm:$0xff]
    %v149 = vld [vmem:[%s2 + $0x98] sm:$0xff]
    %v150 = vld [vmem:[%s2 + $0xa0] sm:$0xff]
    %v151 = vld [vmem:[%s2 + $0xa8] sm:$0xff]
    %v152 = vld [vmem:[%s2 + $0xb0] sm:$0xff]
    %v153 = vld [vmem:[%s2 + $0xb8] sm:$0xff]
    %v154 = vld [vmem:[%s2 + $0xc0] sm:$0xff]
    %v155 = vld [vmem:[%s2 + $0xc8] sm:$0xff]
    %v156 = vld [vmem:[%s2 + $0xd0] sm:$0xff]
    %v157 = vld [vmem:[%s2 + $0xd8] sm:$0xff]
    %v158 = vld [vmem:[%s2 + $0xe0] sm:$0xff]
    %v159 = vld [vmem:[%s2 + $0xe8] sm:$0xff]
    %v160 = vld [vmem:[%s2 + $0xf0] sm:$0xff]
    %v161 = vld [vmem:[%s2 + $0xf8] sm:$0xff]
    %163 = vset.pattern.permute.xlu0 0
    %164 = vperm.xlu0 %163, %v130
    %v165 = vpop.permute.xlu0 %164
    %168 = vset.pattern.permute.xlu0 0
    %169 = vperm.xlu0 %168, %v131
    %v170 = vpop.permute.xlu0 %169
    %173 = vset.pattern.permute.xlu0 0
    %174 = vperm.xlu0 %173, %v132
    %v175 = vpop.permute.xlu0 %174
    %178 = vset.pattern.permute.xlu0 0
    %179 = vperm.xlu0 %178, %v133
    %v180 = vpop.permute.xlu0 %179
    %183 = vset.pattern.permute.xlu0 0
    %184 = vperm.xlu0 %183, %v134
    %v185 = vpop.permute.xlu0 %184
    %188 = vset.pattern.permute.xlu0 0
    %189 = vperm.xlu0 %188, %v135
    %v190 = vpop.permute.xlu0 %189
    %193 = vset.pattern.permute.xlu0 0
    %194 = vperm.xlu0 %193, %v136
    %v195 = vpop.permute.xlu0 %194
    %198 = vset.pattern.permute.xlu0 0
    %199 = vperm.xlu0 %198, %v137
    %v200 = vpop.permute.xlu0 %199
    %203 = vset.pattern.permute.xlu0 0
    %204 = vperm.xlu0 %203, %v138
    %v205 = vpop.permute.xlu0 %204
    %208 = vset.pattern.permute.xlu0 0
    %209 = vperm.xlu0 %208, %v139
    %v210 = vpop.permute.xlu0 %209
    %213 = vset.pattern.permute.xlu0 0
    %214 = vperm.xlu0 %213, %v140
    %v215 = vpop.permute.xlu0 %214
    %218 = vset.pattern.permute.xlu0 0
    %219 = vperm.xlu0 %218, %v141
    %v220 = vpop.permute.xlu0 %219
    %223 = vset.pattern.permute.xlu0 0
    %224 = vperm.xlu0 %223, %v142
    %v225 = vpop.permute.xlu0 %224
    %228 = vset.pattern.permute.xlu0 0
    %229 = vperm.xlu0 %228, %v143
    %v230 = vpop.permute.xlu0 %229
    %233 = vset.pattern.permute.xlu0 0
    %234 = vperm.xlu0 %233, %v144
    %v235 = vpop.permute.xlu0 %234
    %238 = vset.pattern.permute.xlu0 0
    %239 = vperm.xlu0 %238, %v145
    %v240 = vpop.permute.xlu0 %239
    %243 = vset.pattern.permute.xlu0 0
    %244 = vperm.xlu0 %243, %v146
    %v245 = vpop.permute.xlu0 %244
    %248 = vset.pattern.permute.xlu0 0
    %249 = vperm.xlu0 %248, %v147
    %v250 = vpop.permute.xlu0 %249
    %253 = vset.pattern.permute.xlu0 0
    %254 = vperm.xlu0 %253, %v148
    %v255 = vpop.permute.xlu0 %254
    %258 = vset.pattern.permute.xlu0 0
    %259 = vperm.xlu0 %258, %v149
    %v260 = vpop.permute.xlu0 %259
    %263 = vset.pattern.permute.xlu0 0
    %264 = vperm.xlu0 %263, %v150
    %v265 = vpop.permute.xlu0 %264
    %268 = vset.pattern.permute.xlu0 0
    %269 = vperm.xlu0 %268, %v151
    %v270 = vpop.permute.xlu0 %269
    %273 = vset.pattern.permute.xlu0 0
    %274 = vperm.xlu0 %273, %v152
    %v275 = vpop.permute.xlu0 %274
    %278 = vset.pattern.permute.xlu0 0
    %279 = vperm.xlu0 %278, %v153
    %v280 = vpop.permute.xlu0 %279
    %283 = vset.pattern.permute.xlu0 0
    %284 = vperm.xlu0 %283, %v154
    %v285 = vpop.permute.xlu0 %284
    %288 = vset.pattern.permute.xlu0 0
    %289 = vperm.xlu0 %288, %v155
    %v290 = vpop.permute.xlu0 %289
    %293 = vset.pattern.permute.xlu0 0
    %294 = vperm.xlu0 %293, %v156
    %v295 = vpop.permute.xlu0 %294
    %298 = vset.pattern.permute.xlu0 0
    %299 = vperm.xlu0 %298, %v157
    %v300 = vpop.permute.xlu0 %299
    %303 = vset.pattern.permute.xlu0 0
    %304 = vperm.xlu0 %303, %v158
    %v305 = vpop.permute.xlu0 %304
    %308 = vset.pattern.permute.xlu0 0
    %309 = vperm.xlu0 %308, %v159
    %v310 = vpop.permute.xlu0 %309
    %313 = vset.pattern.permute.xlu0 0
    %314 = vperm.xlu0 %313, %v160
    %v315 = vpop.permute.xlu0 %314
    %318 = vset.pattern.permute.xlu0 0
    %319 = vperm.xlu0 %318, %v161
    %v320 = vpop.permute.xlu0 %319
    %vm322 = vcmask 130048
    %v324 = vsel %vm322, %v29, 0
    %v327 = vsel %vm322, %v30, 0
    %v330 = vsel %vm322, %v31, 0
    %v333 = vsel %vm322, %v32, 0
    %v336 = vsel %vm322, %v33, 0
    %v339 = vsel %vm322, %v34, 0
    %v342 = vsel %vm322, %v35, 0
    %v345 = vsel %vm322, %v36, 0
    %v348 = vsel %vm322, %v37, 0
    %v351 = vsel %vm322, %v38, 0
    %v354 = vsel %vm322, %v39, 0
    %v357 = vsel %vm322, %v40, 0
    %v360 = vsel %vm322, %v41, 0
    %v363 = vsel %vm322, %v42, 0
    %v366 = vsel %vm322, %v43, 0
    %v369 = vsel %vm322, %v44, 0
    %v372 = vsel %vm322, %v45, 0
    %v375 = vsel %vm322, %v46, 0
    %v378 = vsel %vm322, %v47, 0
    %v381 = vsel %vm322, %v48, 0
    %v384 = vsel %vm322, %v49, 0
    %v387 = vsel %vm322, %v50, 0
    %v390 = vsel %vm322, %v51, 0
    %v393 = vsel %vm322, %v52, 0
    %v396 = vsel %vm322, %v53, 0
    %v399 = vsel %vm322, %v54, 0
    %v402 = vsel %vm322, %v55, 0
    %v405 = vsel %vm322, %v56, 0
    %v408 = vsel %vm322, %v57, 0
    %v411 = vsel %vm322, %v58, 0
    %v414 = vsel %vm322, %v59, 0
    %v417 = vsel %vm322, %v60, 0
    %419 = vmatpush.msra.mxu0 0.0
    %420 = vmatpush.msra.mxu0 0.0
    %421 = vmatpush.msra.mxu0 0.0
    %422 = vmatpush.msra.mxu0 0.0
    %423 = vmatpush.msra.mxu0 0.0
    %424 = vmatpush.msra.mxu0 0.0
    %425 = vmatpush.msra.mxu0 0.0
    %426 = vmatpush.msra.mxu0 0.0
    %427 = vmatpush.msra.mxu0 0.0
    %428 = vmatpush.msra.mxu0 0.0
    %429 = vmatpush.msra.mxu0 0.0
    %430 = vmatpush.msra.mxu0 0.0
    %431 = vmatpush.msra.mxu0 0.0
    %432 = vmatpush.msra.mxu0 0.0
    %433 = vmatpush.msra.mxu0 %v128
    %434 = vmatpush.msra.mxu0 %v126
    %435 = vmatmul.f32.gmra.mxu0 %v324
    %v436 = vpop.f32.mrf.mxu0
    %v437 = vadd.f32 %v165, %v436
    %438 = vmatmul.f32.gmra.mxu0 %v327
    %v439 = vpop.f32.mrf.mxu0
    %v440 = vadd.f32 %v170, %v439
    %441 = vmatmul.f32.gmra.mxu0 %v330
    %v442 = vpop.f32.mrf.mxu0
    %v443 = vadd.f32 %v175, %v442
    %444 = vmatmul.f32.gmra.mxu0 %v333
    %v445 = vpop.f32.mrf.mxu0
    %v446 = vadd.f32 %v180, %v445
    %447 = vmatmul.f32.gmra.mxu0 %v336
    %v448 = vpop.f32.mrf.mxu0
    %v449 = vadd.f32 %v185, %v448
    %450 = vmatmul.f32.gmra.mxu0 %v339
    %v451 = vpop.f32.mrf.mxu0
    %v452 = vadd.f32 %v190, %v451
    %453 = vmatmul.f32.gmra.mxu0 %v342
    %v454 = vpop.f32.mrf.mxu0
    %v455 = vadd.f32 %v195, %v454
    %456 = vmatmul.f32.gmra.mxu0 %v345
    %v457 = vpop.f32.mrf.mxu0
    %v458 = vadd.f32 %v200, %v457
    %459 = vmatmul.f32.gmra.mxu0 %v348
    %v460 = vpop.f32.mrf.mxu0
    %v461 = vadd.f32 %v205, %v460
    %462 = vmatmul.f32.gmra.mxu0 %v351
    %v463 = vpop.f32.mrf.mxu0
    %v464 = vadd.f32 %v210, %v463
    %465 = vmatmul.f32.gmra.mxu0 %v354
    %v466 = vpop.f32.mrf.mxu0
    %v467 = vadd.f32 %v215, %v466
    %468 = vmatmul.f32.gmra.mxu0 %v357
    %v469 = vpop.f32.mrf.mxu0
    %v470 = vadd.f32 %v220, %v469
    %471 = vmatmul.f32.gmra.mxu0 %v360
    %v472 = vpop.f32.mrf.mxu0
    %v473 = vadd.f32 %v225, %v472
    %474 = vmatmul.f32.gmra.mxu0 %v363
    %v475 = vpop.f32.mrf.mxu0
    %v476 = vadd.f32 %v230, %v475
    %477 = vmatmul.f32.gmra.mxu0 %v366
    %v478 = vpop.f32.mrf.mxu0
    %v479 = vadd.f32 %v235, %v478
    %480 = vmatmul.f32.gmra.mxu0 %v369
    %v481 = vpop.f32.mrf.mxu0
    %v482 = vadd.f32 %v240, %v481
    %483 = vmatmul.f32.gmra.mxu0 %v372
    %v484 = vpop.f32.mrf.mxu0
    %v485 = vadd.f32 %v245, %v484
    %486 = vmatmul.f32.gmra.mxu0 %v375
    %v487 = vpop.f32.mrf.mxu0
    %v488 = vadd.f32 %v250, %v487
    %489 = vmatmul.f32.gmra.mxu0 %v378
    %v490 = vpop.f32.mrf.mxu0
    %v491 = vadd.f32 %v255, %v490
    %492 = vmatmul.f32.gmra.mxu0 %v381
    %v493 = vpop.f32.mrf.mxu0
    %v494 = vadd.f32 %v260, %v493
    %495 = vmatmul.f32.gmra.mxu0 %v384
    %v496 = vpop.f32.mrf.mxu0
    %v497 = vadd.f32 %v265, %v496
    %498 = vmatmul.f32.gmra.mxu0 %v387
    %v499 = vpop.f32.mrf.mxu0
    %v500 = vadd.f32 %v270, %v499
    %501 = vmatmul.f32.gmra.mxu0 %v390
    %v502 = vpop.f32.mrf.mxu0
    %v503 = vadd.f32 %v275, %v502
    %504 = vmatmul.f32.gmra.mxu0 %v393
    %v505 = vpop.f32.mrf.mxu0
    %v506 = vadd.f32 %v280, %v505
    %507 = vmatmul.f32.gmra.mxu0 %v396
    %v508 = vpop.f32.mrf.mxu0
    %v509 = vadd.f32 %v285, %v508
    %510 = vmatmul.f32.gmra.mxu0 %v399
    %v511 = vpop.f32.mrf.mxu0
    %v512 = vadd.f32 %v290, %v511
    %513 = vmatmul.f32.gmra.mxu0 %v402
    %v514 = vpop.f32.mrf.mxu0
    %v515 = vadd.f32 %v295, %v514
    %516 = vmatmul.f32.gmra.mxu0 %v405
    %v517 = vpop.f32.mrf.mxu0
    %v518 = vadd.f32 %v300, %v517
    %519 = vmatmul.f32.gmra.mxu0 %v408
    %v520 = vpop.f32.mrf.mxu0
    %v521 = vadd.f32 %v305, %v520
    %522 = vmatmul.f32.gmra.mxu0 %v411
    %v523 = vpop.f32.mrf.mxu0
    %v524 = vadd.f32 %v310, %v523
    %525 = vmatmul.f32.gmra.mxu0 %v414
    %v526 = vpop.f32.mrf.mxu0
    %v527 = vadd.f32 %v315, %v526
    %528 = vmatmul.f32.gmra.mxu0 %v417
    %v529 = vpop.f32.mrf.mxu0
    %v530 = vadd.f32 %v320, %v529
    %531 = vdwg.mxu0
    %532 = vmatpush.msra.mxu0 0.0
    %533 = vmatpush.msra.mxu0 0.0
    %534 = vmatpush.msra.mxu0 0.0
    %535 = vmatpush.msra.mxu0 0.0
    %536 = vmatpush.msra.mxu0 0.0
    %537 = vmatpush.msra.mxu0 0.0
    %538 = vmatpush.msra.mxu0 0.0
    %539 = vmatpush.msra.mxu0 0.0
    %540 = vmatpush.msra.mxu0 0.0
    %541 = vmatpush.msra.mxu0 0.0
    %542 = vmatpush.msra.mxu0 0.0
    %543 = vmatpush.msra.mxu0 0.0
    %544 = vmatpush.msra.mxu0 0.0
    %545 = vmatpush.msra.mxu0 0.0
    %546 = vmatpush.msra.mxu0 %v129
    %547 = vmatpush.msra.mxu0 %v127
    %548 = vmatmul.f32.gmra.mxu0 %v324
    %v549 = vpop.f32.mrf.mxu0
    %v550 = vadd.f32 %v165, %v549
    %551 = vmatmul.f32.gmra.mxu0 %v327
    %v552 = vpop.f32.mrf.mxu0
    %v553 = vadd.f32 %v170, %v552
    %554 = vmatmul.f32.gmra.mxu0 %v330
    %v555 = vpop.f32.mrf.mxu0
    %v556 = vadd.f32 %v175, %v555
    %557 = vmatmul.f32.gmra.mxu0 %v333
    %v558 = vpop.f32.mrf.mxu0
    %v559 = vadd.f32 %v180, %v558
    %560 = vmatmul.f32.gmra.mxu0 %v336
    %v561 = vpop.f32.mrf.mxu0
    %v562 = vadd.f32 %v185, %v561
    %563 = vmatmul.f32.gmra.mxu0 %v339
    %v564 = vpop.f32.mrf.mxu0
    %v565 = vadd.f32 %v190, %v564
    %566 = vmatmul.f32.gmra.mxu0 %v342
    %v567 = vpop.f32.mrf.mxu0
    %v568 = vadd.f32 %v195, %v567
    %569 = vmatmul.f32.gmra.mxu0 %v345
    %v570 = vpop.f32.mrf.mxu0
    %v571 = vadd.f32 %v200, %v570
    %572 = vmatmul.f32.gmra.mxu0 %v348
    %v573 = vpop.f32.mrf.mxu0
    %v574 = vadd.f32 %v205, %v573
    %575 = vmatmul.f32.gmra.mxu0 %v351
    %v576 = vpop.f32.mrf.mxu0
    %v577 = vadd.f32 %v210, %v576
    %578 = vmatmul.f32.gmra.mxu0 %v354
    %v579 = vpop.f32.mrf.mxu0
    %v580 = vadd.f32 %v215, %v579
    %581 = vmatmul.f32.gmra.mxu0 %v357
    %v582 = vpop.f32.mrf.mxu0
    %v583 = vadd.f32 %v220, %v582
    %584 = vmatmul.f32.gmra.mxu0 %v360
    %v585 = vpop.f32.mrf.mxu0
    %v586 = vadd.f32 %v225, %v585
    %587 = vmatmul.f32.gmra.mxu0 %v363
    %v588 = vpop.f32.mrf.mxu0
    %v589 = vadd.f32 %v230, %v588
    %590 = vmatmul.f32.gmra.mxu0 %v366
    %v591 = vpop.f32.mrf.mxu0
    %v592 = vadd.f32 %v235, %v591
    %593 = vmatmul.f32.gmra.mxu0 %v369
    %v594 = vpop.f32.mrf.mxu0
    %v595 = vadd.f32 %v240, %v594
    %596 = vmatmul.f32.gmra.mxu0 %v372
    %v597 = vpop.f32.mrf.mxu0
    %v598 = vadd.f32 %v245, %v597
    %599 = vmatmul.f32.gmra.mxu0 %v375
    %v600 = vpop.f32.mrf.mxu0
    %v601 = vadd.f32 %v250, %v600
    %602 = vmatmul.f32.gmra.mxu0 %v378
    %v603 = vpop.f32.mrf.mxu0
    %v604 = vadd.f32 %v255, %v603
    %605 = vmatmul.f32.gmra.mxu0 %v381
    %v606 = vpop.f32.mrf.mxu0
    %v607 = vadd.f32 %v260, %v606
    %608 = vmatmul.f32.gmra.mxu0 %v384
    %v609 = vpop.f32.mrf.mxu0
    %v610 = vadd.f32 %v265, %v609
    %611 = vmatmul.f32.gmra.mxu0 %v387
    %v612 = vpop.f32.mrf.mxu0
    %v613 = vadd.f32 %v270, %v612
    %614 = vmatmul.f32.gmra.mxu0 %v390
    %v615 = vpop.f32.mrf.mxu0
    %v616 = vadd.f32 %v275, %v615
    %617 = vmatmul.f32.gmra.mxu0 %v393
    %v618 = vpop.f32.mrf.mxu0
    %v619 = vadd.f32 %v280, %v618
    %620 = vmatmul.f32.gmra.mxu0 %v396
    %v621 = vpop.f32.mrf.mxu0
    %v622 = vadd.f32 %v285, %v621
    %623 = vmatmul.f32.gmra.mxu0 %v399
    %v624 = vpop.f32.mrf.mxu0
    %v625 = vadd.f32 %v290, %v624
    %626 = vmatmul.f32.gmra.mxu0 %v402
    %v627 = vpop.f32.mrf.mxu0
    %v628 = vadd.f32 %v295, %v627
    %629 = vmatmul.f32.gmra.mxu0 %v405
    %v630 = vpop.f32.mrf.mxu0
    %v631 = vadd.f32 %v300, %v630
    %632 = vmatmul.f32.gmra.mxu0 %v408
    %v633 = vpop.f32.mrf.mxu0
    %v634 = vadd.f32 %v305, %v633
    %635 = vmatmul.f32.gmra.mxu0 %v411
    %v636 = vpop.f32.mrf.mxu0
    %v637 = vadd.f32 %v310, %v636
    %638 = vmatmul.f32.gmra.mxu0 %v414
    %v639 = vpop.f32.mrf.mxu0
    %v640 = vadd.f32 %v315, %v639
    %641 = vmatmul.f32.gmra.mxu0 %v417
    %v642 = vpop.f32.mrf.mxu0
    %v643 = vadd.f32 %v320, %v642
    %644 = vdwg.mxu0
    %v645 = vmax.f32 %v437, 0.0
    %v646 = vmax.f32 %v550, 0.0
    %v647 = vmax.f32 %v440, 0.0
    %v648 = vmax.f32 %v553, 0.0
    %v649 = vmax.f32 %v443, 0.0
    %v650 = vmax.f32 %v556, 0.0
    %v651 = vmax.f32 %v446, 0.0
    %v652 = vmax.f32 %v559, 0.0
    %v653 = vmax.f32 %v449, 0.0
    %v654 = vmax.f32 %v562, 0.0
    %v655 = vmax.f32 %v452, 0.0
    %v656 = vmax.f32 %v565, 0.0
    %v657 = vmax.f32 %v455, 0.0
    %v658 = vmax.f32 %v568, 0.0
    %v659 = vmax.f32 %v458, 0.0
    %v660 = vmax.f32 %v571, 0.0
    %v661 = vmax.f32 %v461, 0.0
    %v662 = vmax.f32 %v574, 0.0
    %v663 = vmax.f32 %v464, 0.0
    %v664 = vmax.f32 %v577, 0.0
    %v665 = vmax.f32 %v467, 0.0
    %v666 = vmax.f32 %v580, 0.0
    %v667 = vmax.f32 %v470, 0.0
    %v668 = vmax.f32 %v583, 0.0
    %v669 = vmax.f32 %v473, 0.0
    %v670 = vmax.f32 %v586, 0.0
    %v671 = vmax.f32 %v476, 0.0
    %v672 = vmax.f32 %v589, 0.0
    %v673 = vmax.f32 %v479, 0.0
    %v674 = vmax.f32 %v592, 0.0
    %v675 = vmax.f32 %v482, 0.0
    %v676 = vmax.f32 %v595, 0.0
    %v677 = vmax.f32 %v485, 0.0
    %v678 = vmax.f32 %v598, 0.0
    %v679 = vmax.f32 %v488, 0.0
    %v680 = vmax.f32 %v601, 0.0
    %v681 = vmax.f32 %v491, 0.0
    %v682 = vmax.f32 %v604, 0.0
    %v683 = vmax.f32 %v494, 0.0
    %v684 = vmax.f32 %v607, 0.0
    %v685 = vmax.f32 %v497, 0.0
    %v686 = vmax.f32 %v610, 0.0
    %v687 = vmax.f32 %v500, 0.0
    %v688 = vmax.f32 %v613, 0.0
    %v689 = vmax.f32 %v503, 0.0
    %v690 = vmax.f32 %v616, 0.0
    %v691 = vmax.f32 %v506, 0.0
    %v692 = vmax.f32 %v619, 0.0
    %v693 = vmax.f32 %v509, 0.0
    %v694 = vmax.f32 %v622, 0.0
    %v695 = vmax.f32 %v512, 0.0
    %v696 = vmax.f32 %v625, 0.0
    %v697 = vmax.f32 %v515, 0.0
    %v698 = vmax.f32 %v628, 0.0
    %v699 = vmax.f32 %v518, 0.0
    %v700 = vmax.f32 %v631, 0.0
    %v701 = vmax.f32 %v521, 0.0
    %v702 = vmax.f32 %v634, 0.0
    %v703 = vmax.f32 %v524, 0.0
    %v704 = vmax.f32 %v637, 0.0
    %v705 = vmax.f32 %v527, 0.0
    %v706 = vmax.f32 %v640, 0.0
    %v707 = vmax.f32 %v530, 0.0
    %v708 = vmax.f32 %v643, 0.0
    %v709 = vld [vmem:[%s4] sm:$0xff]
    %v710 = vld [vmem:[%s4 + $0x8] sm:$0xff]
    %v711 = vld [vmem:[%s4 + $0x10] sm:$0xff]
    %v712 = vld [vmem:[%s4 + $0x18] sm:$0xff]
    %v713 = vld [vmem:[%s4 + $0x20] sm:$0xff]
    %v714 = vld [vmem:[%s4 + $0x28] sm:$0xff]
    %v715 = vld [vmem:[%s4 + $0x30] sm:$0xff]
    %v716 = vld [vmem:[%s4 + $0x38] sm:$0xff]
    %v717 = vld [vmem:[%s4 + $0x40] sm:$0xff]
    %v718 = vld [vmem:[%s4 + $0x48] sm:$0xff]
    %v719 = vld [vmem:[%s4 + $0x50] sm:$0xff]
    %v720 = vld [vmem:[%s4 + $0x58] sm:$0xff]
    %v721 = vld [vmem:[%s4 + $0x60] sm:$0xff]
    %v722 = vld [vmem:[%s4 + $0x68] sm:$0xff]
    %v723 = vld [vmem:[%s4 + $0x70] sm:$0xff]
    %v724 = vld [vmem:[%s4 + $0x78] sm:$0xff]
    %v725 = vld [vmem:[%s4 + $0x80] sm:$0xff]
    %v726 = vld [vmem:[%s4 + $0x88] sm:$0xff]
    %v727 = vld [vmem:[%s4 + $0x90] sm:$0xff]
    %v728 = vld [vmem:[%s4 + $0x98] sm:$0xff]
    %v729 = vld [vmem:[%s4 + $0xa0] sm:$0xff]
    %v730 = vld [vmem:[%s4 + $0xa8] sm:$0xff]
    %v731 = vld [vmem:[%s4 + $0xb0] sm:$0xff]
    %v732 = vld [vmem:[%s4 + $0xb8] sm:$0xff]
    %v733 = vld [vmem:[%s4 + $0xc0] sm:$0xff]
    %v734 = vld [vmem:[%s4 + $0xc8] sm:$0xff]
    %v735 = vld [vmem:[%s4 + $0xd0] sm:$0xff]
    %v736 = vld [vmem:[%s4 + $0xd8] sm:$0xff]
    %v737 = vld [vmem:[%s4 + $0xe0] sm:$0xff]
    %v738 = vld [vmem:[%s4 + $0xe8] sm:$0xff]
    %v739 = vld [vmem:[%s4 + $0xf0] sm:$0xff]
    %v740 = vld [vmem:[%s4 + $0xf8] sm:$0xff]
    %742 = vset.pattern.permute.xlu0 0
    %743 = vperm.xlu0 %742, %v709
    %v744 = vpop.permute.xlu0 %743
    %747 = vset.pattern.permute.xlu0 0
    %748 = vperm.xlu0 %747, %v710
    %v749 = vpop.permute.xlu0 %748
    %752 = vset.pattern.permute.xlu0 0
    %753 = vperm.xlu0 %752, %v711
    %v754 = vpop.permute.xlu0 %753
    %757 = vset.pattern.permute.xlu0 0
    %758 = vperm.xlu0 %757, %v712
    %v759 = vpop.permute.xlu0 %758
    %762 = vset.pattern.permute.xlu0 0
    %763 = vperm.xlu0 %762, %v713
    %v764 = vpop.permute.xlu0 %763
    %767 = vset.pattern.permute.xlu0 0
    %768 = vperm.xlu0 %767, %v714
    %v769 = vpop.permute.xlu0 %768
    %772 = vset.pattern.permute.xlu0 0
    %773 = vperm.xlu0 %772, %v715
    %v774 = vpop.permute.xlu0 %773
    %777 = vset.pattern.permute.xlu0 0
    %778 = vperm.xlu0 %777, %v716
    %v779 = vpop.permute.xlu0 %778
    %782 = vset.pattern.permute.xlu0 0
    %783 = vperm.xlu0 %782, %v717
    %v784 = vpop.permute.xlu0 %783
    %787 = vset.pattern.permute.xlu0 0
    %788 = vperm.xlu0 %787, %v718
    %v789 = vpop.permute.xlu0 %788
    %792 = vset.pattern.permute.xlu0 0
    %793 = vperm.xlu0 %792, %v719
    %v794 = vpop.permute.xlu0 %793
    %797 = vset.pattern.permute.xlu0 0
    %798 = vperm.xlu0 %797, %v720
    %v799 = vpop.permute.xlu0 %798
    %802 = vset.pattern.permute.xlu0 0
    %803 = vperm.xlu0 %802, %v721
    %v804 = vpop.permute.xlu0 %803
    %807 = vset.pattern.permute.xlu0 0
    %808 = vperm.xlu0 %807, %v722
    %v809 = vpop.permute.xlu0 %808
    %812 = vset.pattern.permute.xlu0 0
    %813 = vperm.xlu0 %812, %v723
    %v814 = vpop.permute.xlu0 %813
    %817 = vset.pattern.permute.xlu0 0
    %818 = vperm.xlu0 %817, %v724
    %v819 = vpop.permute.xlu0 %818
    %822 = vset.pattern.permute.xlu0 0
    %823 = vperm.xlu0 %822, %v725
    %v824 = vpop.permute.xlu0 %823
    %827 = vset.pattern.permute.xlu0 0
    %828 = vperm.xlu0 %827, %v726
    %v829 = vpop.permute.xlu0 %828
    %832 = vset.pattern.permute.xlu0 0
    %833 = vperm.xlu0 %832, %v727
    %v834 = vpop.permute.xlu0 %833
    %837 = vset.pattern.permute.xlu0 0
    %838 = vperm.xlu0 %837, %v728
    %v839 = vpop.permute.xlu0 %838
    %842 = vset.pattern.permute.xlu0 0
    %843 = vperm.xlu0 %842, %v729
    %v844 = vpop.permute.xlu0 %843
    %847 = vset.pattern.permute.xlu0 0
    %848 = vperm.xlu0 %847, %v730
    %v849 = vpop.permute.xlu0 %848
    %852 = vset.pattern.permute.xlu0 0
    %853 = vperm.xlu0 %852, %v731
    %v854 = vpop.permute.xlu0 %853
    %857 = vset.pattern.permute.xlu0 0
    %858 = vperm.xlu0 %857, %v732
    %v859 = vpop.permute.xlu0 %858
    %862 = vset.pattern.permute.xlu0 0
    %863 = vperm.xlu0 %862, %v733
    %v864 = vpop.permute.xlu0 %863
    %867 = vset.pattern.permute.xlu0 0
    %868 = vperm.xlu0 %867, %v734
    %v869 = vpop.permute.xlu0 %868
    %872 = vset.pattern.permute.xlu0 0
    %873 = vperm.xlu0 %872, %v735
    %v874 = vpop.permute.xlu0 %873
    %877 = vset.pattern.permute.xlu0 0
    %878 = vperm.xlu0 %877, %v736
    %v879 = vpop.permute.xlu0 %878
    %882 = vset.pattern.permute.xlu0 0
    %883 = vperm.xlu0 %882, %v737
    %v884 = vpop.permute.xlu0 %883
    %887 = vset.pattern.permute.xlu0 0
    %888 = vperm.xlu0 %887, %v738
    %v889 = vpop.permute.xlu0 %888
    %892 = vset.pattern.permute.xlu0 0
    %893 = vperm.xlu0 %892, %v739
    %v894 = vpop.permute.xlu0 %893
    %897 = vset.pattern.permute.xlu0 0
    %898 = vperm.xlu0 %897, %v740
    %v899 = vpop.permute.xlu0 %898
    %901 = vmatpush.msra.mxu0 %v675
    %902 = vmatpush.msra.mxu0 %v673
    %903 = vmatpush.msra.mxu0 %v671
    %904 = vmatpush.msra.mxu0 %v669
    %905 = vmatpush.msra.mxu0 %v667
    %906 = vmatpush.msra.mxu0 %v665
    %907 = vmatpush.msra.mxu0 %v663
    %908 = vmatpush.msra.mxu0 %v661
    %909 = vmatpush.msra.mxu0 %v659
    %910 = vmatpush.msra.mxu0 %v657
    %911 = vmatpush.msra.mxu0 %v655
    %912 = vmatpush.msra.mxu0 %v653
    %913 = vmatpush.msra.mxu0 %v651
    %914 = vmatpush.msra.mxu0 %v649
    %915 = vmatpush.msra.mxu0 %v647
    %916 = vmatpush.msra.mxu0 %v645
    %917 = vmatmul.f32.gmra.mxu0 %v61
    %v918 = vpop.f32.mrf.mxu0
    %v919 = vadd.f32 %v744, %v918
    %920 = vmatmul.f32.gmra.mxu0 %v63
    %v921 = vpop.f32.mrf.mxu0
    %v922 = vadd.f32 %v749, %v921
    %923 = vmatmul.f32.gmra.mxu0 %v65
    %v924 = vpop.f32.mrf.mxu0
    %v925 = vadd.f32 %v754, %v924
    %926 = vmatmul.f32.gmra.mxu0 %v67
    %v927 = vpop.f32.mrf.mxu0
    %v928 = vadd.f32 %v759, %v927
    %929 = vmatmul.f32.gmra.mxu0 %v69
    %v930 = vpop.f32.mrf.mxu0
    %v931 = vadd.f32 %v764, %v930
    %932 = vmatmul.f32.gmra.mxu0 %v71
    %v933 = vpop.f32.mrf.mxu0
    %v934 = vadd.f32 %v769, %v933
    %935 = vmatmul.f32.gmra.mxu0 %v73
    %v936 = vpop.f32.mrf.mxu0
    %v937 = vadd.f32 %v774, %v936
    %938 = vmatmul.f32.gmra.mxu0 %v75
    %v939 = vpop.f32.mrf.mxu0
    %v940 = vadd.f32 %v779, %v939
    %941 = vmatmul.f32.gmra.mxu0 %v77
    %v942 = vpop.f32.mrf.mxu0
    %v943 = vadd.f32 %v784, %v942
    %944 = vmatmul.f32.gmra.mxu0 %v79
    %v945 = vpop.f32.mrf.mxu0
    %v946 = vadd.f32 %v789, %v945
    %947 = vmatmul.f32.gmra.mxu0 %v81
    %v948 = vpop.f32.mrf.mxu0
    %v949 = vadd.f32 %v794, %v948
    %950 = vmatmul.f32.gmra.mxu0 %v83
    %v951 = vpop.f32.mrf.mxu0
    %v952 = vadd.f32 %v799, %v951
    %953 = vmatmul.f32.gmra.mxu0 %v85
    %v954 = vpop.f32.mrf.mxu0
    %v955 = vadd.f32 %v804, %v954
    %956 = vmatmul.f32.gmra.mxu0 %v87
    %v957 = vpop.f32.mrf.mxu0
    %v958 = vadd.f32 %v809, %v957
    %959 = vmatmul.f32.gmra.mxu0 %v89
    %v960 = vpop.f32.mrf.mxu0
    %v961 = vadd.f32 %v814, %v960
    %962 = vmatmul.f32.gmra.mxu0 %v91
    %v963 = vpop.f32.mrf.mxu0
    %v964 = vadd.f32 %v819, %v963
    %965 = vmatmul.f32.gmra.mxu0 %v93
    %v966 = vpop.f32.mrf.mxu0
    %v967 = vadd.f32 %v824, %v966
    %968 = vmatmul.f32.gmra.mxu0 %v95
    %v969 = vpop.f32.mrf.mxu0
    %v970 = vadd.f32 %v829, %v969
    %971 = vmatmul.f32.gmra.mxu0 %v97
    %v972 = vpop.f32.mrf.mxu0
    %v973 = vadd.f32 %v834, %v972
    %974 = vmatmul.f32.gmra.mxu0 %v99
    %v975 = vpop.f32.mrf.mxu0
    %v976 = vadd.f32 %v839, %v975
    %977 = vmatmul.f32.gmra.mxu0 %v101
    %v978 = vpop.f32.mrf.mxu0
    %v979 = vadd.f32 %v844, %v978
    %980 = vmatmul.f32.gmra.mxu0 %v103
    %v981 = vpop.f32.mrf.mxu0
    %v982 = vadd.f32 %v849, %v981
    %983 = vmatmul.f32.gmra.mxu0 %v105
    %v984 = vpop.f32.mrf.mxu0
    %v985 = vadd.f32 %v854, %v984
    %986 = vmatmul.f32.gmra.mxu0 %v107
    %v987 = vpop.f32.mrf.mxu0
    %v988 = vadd.f32 %v859, %v987
    %989 = vmatmul.f32.gmra.mxu0 %v109
    %v990 = vpop.f32.mrf.mxu0
    %v991 = vadd.f32 %v864, %v990
    %992 = vmatmul.f32.gmra.mxu0 %v111
    %v993 = vpop.f32.mrf.mxu0
    %v994 = vadd.f32 %v869, %v993
    %995 = vmatmul.f32.gmra.mxu0 %v113
    %v996 = vpop.f32.mrf.mxu0
    %v997 = vadd.f32 %v874, %v996
    %998 = vmatmul.f32.gmra.mxu0 %v115
    %v999 = vpop.f32.mrf.mxu0
    %v1000 = vadd.f32 %v879, %v999
    %1001 = vmatmul.f32.gmra.mxu0 %v117
    %v1002 = vpop.f32.mrf.mxu0
    %v1003 = vadd.f32 %v884, %v1002
    %1004 = vmatmul.f32.gmra.mxu0 %v119
    %v1005 = vpop.f32.mrf.mxu0
    %v1006 = vadd.f32 %v889, %v1005
    %1007 = vmatmul.f32.gmra.mxu0 %v121
    %v1008 = vpop.f32.mrf.mxu0
    %v1009 = vadd.f32 %v894, %v1008
    %1010 = vmatmul.f32.gmra.mxu0 %v123
    %v1011 = vpop.f32.mrf.mxu0
    %v1012 = vadd.f32 %v899, %v1011
    %1013 = vdwg.mxu0
    %1014 = vmatpush.msra.mxu0 %v707
    %1015 = vmatpush.msra.mxu0 %v705
    %1016 = vmatpush.msra.mxu0 %v703
    %1017 = vmatpush.msra.mxu0 %v701
    %1018 = vmatpush.msra.mxu0 %v699
    %1019 = vmatpush.msra.mxu0 %v697
    %1020 = vmatpush.msra.mxu0 %v695
    %1021 = vmatpush.msra.mxu0 %v693
    %1022 = vmatpush.msra.mxu0 %v691
    %1023 = vmatpush.msra.mxu0 %v689
    %1024 = vmatpush.msra.mxu0 %v687
    %1025 = vmatpush.msra.mxu0 %v685
    %1026 = vmatpush.msra.mxu0 %v683
    %1027 = vmatpush.msra.mxu0 %v681
    %1028 = vmatpush.msra.mxu0 %v679
    %1029 = vmatpush.msra.mxu0 %v677
    %1030 = vmatmul.f32.gmra.mxu0 %v62
    %v1031 = vpop.f32.mrf.mxu0
    %v1032 = vadd.f32 %v919, %v1031
    %1033 = vmatmul.f32.gmra.mxu0 %v64
    %v1034 = vpop.f32.mrf.mxu0
    %v1035 = vadd.f32 %v922, %v1034
    %1036 = vmatmul.f32.gmra.mxu0 %v66
    %v1037 = vpop.f32.mrf.mxu0
    %v1038 = vadd.f32 %v925, %v1037
    %1039 = vmatmul.f32.gmra.mxu0 %v68
    %v1040 = vpop.f32.mrf.mxu0
    %v1041 = vadd.f32 %v928, %v1040
    %1042 = vmatmul.f32.gmra.mxu0 %v70
    %v1043 = vpop.f32.mrf.mxu0
    %v1044 = vadd.f32 %v931, %v1043
    %1045 = vmatmul.f32.gmra.mxu0 %v72
    %v1046 = vpop.f32.mrf.mxu0
    %v1047 = vadd.f32 %v934, %v1046
    %1048 = vmatmul.f32.gmra.mxu0 %v74
    %v1049 = vpop.f32.mrf.mxu0
    %v1050 = vadd.f32 %v937, %v1049
    %1051 = vmatmul.f32.gmra.mxu0 %v76
    %v1052 = vpop.f32.mrf.mxu0
    %v1053 = vadd.f32 %v940, %v1052
    %1054 = vmatmul.f32.gmra.mxu0 %v78
    %v1055 = vpop.f32.mrf.mxu0
    %v1056 = vadd.f32 %v943, %v1055
    %1057 = vmatmul.f32.gmra.mxu0 %v80
    %v1058 = vpop.f32.mrf.mxu0
    %v1059 = vadd.f32 %v946, %v1058
    %1060 = vmatmul.f32.gmra.mxu0 %v82
    %v1061 = vpop.f32.mrf.mxu0
    %v1062 = vadd.f32 %v949, %v1061
    %1063 = vmatmul.f32.gmra.mxu0 %v84
    %v1064 = vpop.f32.mrf.mxu0
    %v1065 = vadd.f32 %v952, %v1064
    %1066 = vmatmul.f32.gmra.mxu0 %v86
    %v1067 = vpop.f32.mrf.mxu0
    %v1068 = vadd.f32 %v955, %v1067
    %1069 = vmatmul.f32.gmra.mxu0 %v88
    %v1070 = vpop.f32.mrf.mxu0
    %v1071 = vadd.f32 %v958, %v1070
    %1072 = vmatmul.f32.gmra.mxu0 %v90
    %v1073 = vpop.f32.mrf.mxu0
    %v1074 = vadd.f32 %v961, %v1073
    %1075 = vmatmul.f32.gmra.mxu0 %v92
    %v1076 = vpop.f32.mrf.mxu0
    %v1077 = vadd.f32 %v964, %v1076
    %1078 = vmatmul.f32.gmra.mxu0 %v94
    %v1079 = vpop.f32.mrf.mxu0
    %v1080 = vadd.f32 %v967, %v1079
    %1081 = vmatmul.f32.gmra.mxu0 %v96
    %v1082 = vpop.f32.mrf.mxu0
    %v1083 = vadd.f32 %v970, %v1082
    %1084 = vmatmul.f32.gmra.mxu0 %v98
    %v1085 = vpop.f32.mrf.mxu0
    %v1086 = vadd.f32 %v973, %v1085
    %1087 = vmatmul.f32.gmra.mxu0 %v100
    %v1088 = vpop.f32.mrf.mxu0
    %v1089 = vadd.f32 %v976, %v1088
    %1090 = vmatmul.f32.gmra.mxu0 %v102
    %v1091 = vpop.f32.mrf.mxu0
    %v1092 = vadd.f32 %v979, %v1091
    %1093 = vmatmul.f32.gmra.mxu0 %v104
    %v1094 = vpop.f32.mrf.mxu0
    %v1095 = vadd.f32 %v982, %v1094
    %1096 = vmatmul.f32.gmra.mxu0 %v106
    %v1097 = vpop.f32.mrf.mxu0
    %v1098 = vadd.f32 %v985, %v1097
    %1099 = vmatmul.f32.gmra.mxu0 %v108
    %v1100 = vpop.f32.mrf.mxu0
    %v1101 = vadd.f32 %v988, %v1100
    %1102 = vmatmul.f32.gmra.mxu0 %v110
    %v1103 = vpop.f32.mrf.mxu0
    %v1104 = vadd.f32 %v991, %v1103
    %1105 = vmatmul.f32.gmra.mxu0 %v112
    %v1106 = vpop.f32.mrf.mxu0
    %v1107 = vadd.f32 %v994, %v1106
    %1108 = vmatmul.f32.gmra.mxu0 %v114
    %v1109 = vpop.f32.mrf.mxu0
    %v1110 = vadd.f32 %v997, %v1109
    %1111 = vmatmul.f32.gmra.mxu0 %v116
    %v1112 = vpop.f32.mrf.mxu0
    %v1113 = vadd.f32 %v1000, %v1112
    %1114 = vmatmul.f32.gmra.mxu0 %v118
    %v1115 = vpop.f32.mrf.mxu0
    %v1116 = vadd.f32 %v1003, %v1115
    %1117 = vmatmul.f32.gmra.mxu0 %v120
    %v1118 = vpop.f32.mrf.mxu0
    %v1119 = vadd.f32 %v1006, %v1118
    %1120 = vmatmul.f32.gmra.mxu0 %v122
    %v1121 = vpop.f32.mrf.mxu0
    %v1122 = vadd.f32 %v1009, %v1121
    %1123 = vmatmul.f32.gmra.mxu0 %v124
    %v1124 = vpop.f32.mrf.mxu0
    %v1125 = vadd.f32 %v1012, %v1124
    %1126 = vdwg.mxu0
    %1127 = vmatpush.msra.mxu0 %v676
    %1128 = vmatpush.msra.mxu0 %v674
    %1129 = vmatpush.msra.mxu0 %v672
    %1130 = vmatpush.msra.mxu0 %v670
    %1131 = vmatpush.msra.mxu0 %v668
    %1132 = vmatpush.msra.mxu0 %v666
    %1133 = vmatpush.msra.mxu0 %v664
    %1134 = vmatpush.msra.mxu0 %v662
    %1135 = vmatpush.msra.mxu0 %v660
    %1136 = vmatpush.msra.mxu0 %v658
    %1137 = vmatpush.msra.mxu0 %v656
    %1138 = vmatpush.msra.mxu0 %v654
    %1139 = vmatpush.msra.mxu0 %v652
    %1140 = vmatpush.msra.mxu0 %v650
    %1141 = vmatpush.msra.mxu0 %v648
    %1142 = vmatpush.msra.mxu0 %v646
    %1143 = vmatmul.f32.gmra.mxu0 %v61
    %v1144 = vpop.f32.mrf.mxu0
    %v1145 = vadd.f32 %v744, %v1144
    %1146 = vmatmul.f32.gmra.mxu0 %v63
    %v1147 = vpop.f32.mrf.mxu0
    %v1148 = vadd.f32 %v749, %v1147
    %1149 = vmatmul.f32.gmra.mxu0 %v65
    %v1150 = vpop.f32.mrf.mxu0
    %v1151 = vadd.f32 %v754, %v1150
    %1152 = vmatmul.f32.gmra.mxu0 %v67
    %v1153 = vpop.f32.mrf.mxu0
    %v1154 = vadd.f32 %v759, %v1153
    %1155 = vmatmul.f32.gmra.mxu0 %v69
    %v1156 = vpop.f32.mrf.mxu0
    %v1157 = vadd.f32 %v764, %v1156
    %1158 = vmatmul.f32.gmra.mxu0 %v71
    %v1159 = vpop.f32.mrf.mxu0
    %v1160 = vadd.f32 %v769, %v1159
    %1161 = vmatmul.f32.gmra.mxu0 %v73
    %v1162 = vpop.f32.mrf.mxu0
    %v1163 = vadd.f32 %v774, %v1162
    %1164 = vmatmul.f32.gmra.mxu0 %v75
    %v1165 = vpop.f32.mrf.mxu0
    %v1166 = vadd.f32 %v779, %v1165
    %1167 = vmatmul.f32.gmra.mxu0 %v77
    %v1168 = vpop.f32.mrf.mxu0
    %v1169 = vadd.f32 %v784, %v1168
    %1170 = vmatmul.f32.gmra.mxu0 %v79
    %v1171 = vpop.f32.mrf.mxu0
    %v1172 = vadd.f32 %v789, %v1171
    %1173 = vmatmul.f32.gmra.mxu0 %v81
    %v1174 = vpop.f32.mrf.mxu0
    %v1175 = vadd.f32 %v794, %v1174
    %1176 = vmatmul.f32.gmra.mxu0 %v83
    %v1177 = vpop.f32.mrf.mxu0
    %v1178 = vadd.f32 %v799, %v1177
    %1179 = vmatmul.f32.gmra.mxu0 %v85
    %v1180 = vpop.f32.mrf.mxu0
    %v1181 = vadd.f32 %v804, %v1180
    %1182 = vmatmul.f32.gmra.mxu0 %v87
    %v1183 = vpop.f32.mrf.mxu0
    %v1184 = vadd.f32 %v809, %v1183
    %1185 = vmatmul.f32.gmra.mxu0 %v89
    %v1186 = vpop.f32.mrf.mxu0
    %v1187 = vadd.f32 %v814, %v1186
    %1188 = vmatmul.f32.gmra.mxu0 %v91
    %v1189 = vpop.f32.mrf.mxu0
    %v1190 = vadd.f32 %v819, %v1189
    %1191 = vmatmul.f32.gmra.mxu0 %v93
    %v1192 = vpop.f32.mrf.mxu0
    %v1193 = vadd.f32 %v824, %v1192
    %1194 = vmatmul.f32.gmra.mxu0 %v95
    %v1195 = vpop.f32.mrf.mxu0
    %v1196 = vadd.f32 %v829, %v1195
    %1197 = vmatmul.f32.gmra.mxu0 %v97
    %v1198 = vpop.f32.mrf.mxu0
    %v1199 = vadd.f32 %v834, %v1198
    %1200 = vmatmul.f32.gmra.mxu0 %v99
    %v1201 = vpop.f32.mrf.mxu0
    %v1202 = vadd.f32 %v839, %v1201
    %1203 = vmatmul.f32.gmra.mxu0 %v101
    %v1204 = vpop.f32.mrf.mxu0
    %v1205 = vadd.f32 %v844, %v1204
    %1206 = vmatmul.f32.gmra.mxu0 %v103
    %v1207 = vpop.f32.mrf.mxu0
    %v1208 = vadd.f32 %v849, %v1207
    %1209 = vmatmul.f32.gmra.mxu0 %v105
    %v1210 = vpop.f32.mrf.mxu0
    %v1211 = vadd.f32 %v854, %v1210
    %1212 = vmatmul.f32.gmra.mxu0 %v107
    %v1213 = vpop.f32.mrf.mxu0
    %v1214 = vadd.f32 %v859, %v1213
    %1215 = vmatmul.f32.gmra.mxu0 %v109
    %v1216 = vpop.f32.mrf.mxu0
    %v1217 = vadd.f32 %v864, %v1216
    %1218 = vmatmul.f32.gmra.mxu0 %v111
    %v1219 = vpop.f32.mrf.mxu0
    %v1220 = vadd.f32 %v869, %v1219
    %1221 = vmatmul.f32.gmra.mxu0 %v113
    %v1222 = vpop.f32.mrf.mxu0
    %v1223 = vadd.f32 %v874, %v1222
    %1224 = vmatmul.f32.gmra.mxu0 %v115
    %v1225 = vpop.f32.mrf.mxu0
    %v1226 = vadd.f32 %v879, %v1225
    %1227 = vmatmul.f32.gmra.mxu0 %v117
    %v1228 = vpop.f32.mrf.mxu0
    %v1229 = vadd.f32 %v884, %v1228
    %1230 = vmatmul.f32.gmra.mxu0 %v119
    %v1231 = vpop.f32.mrf.mxu0
    %v1232 = vadd.f32 %v889, %v1231
    %1233 = vmatmul.f32.gmra.mxu0 %v121
    %v1234 = vpop.f32.mrf.mxu0
    %v1235 = vadd.f32 %v894, %v1234
    %1236 = vmatmul.f32.gmra.mxu0 %v123
    %v1237 = vpop.f32.mrf.mxu0
    %v1238 = vadd.f32 %v899, %v1237
    %1239 = vdwg.mxu0
    %1240 = vmatpush.msra.mxu0 %v708
    %1241 = vmatpush.msra.mxu0 %v706
    %1242 = vmatpush.msra.mxu0 %v704
    %1243 = vmatpush.msra.mxu0 %v702
    %1244 = vmatpush.msra.mxu0 %v700
    %1245 = vmatpush.msra.mxu0 %v698
    %1246 = vmatpush.msra.mxu0 %v696
    %1247 = vmatpush.msra.mxu0 %v694
    %1248 = vmatpush.msra.mxu0 %v692
    %1249 = vmatpush.msra.mxu0 %v690
    %1250 = vmatpush.msra.mxu0 %v688
    %1251 = vmatpush.msra.mxu0 %v686
    %1252 = vmatpush.msra.mxu0 %v684
    %1253 = vmatpush.msra.mxu0 %v682
    %1254 = vmatpush.msra.mxu0 %v680
    %1255 = vmatpush.msra.mxu0 %v678
    %1256 = vmatmul.f32.gmra.mxu0 %v62
    %v1257 = vpop.f32.mrf.mxu0
    %v1258 = vadd.f32 %v1145, %v1257
    %1259 = vmatmul.f32.gmra.mxu0 %v64
    %v1260 = vpop.f32.mrf.mxu0
    %v1261 = vadd.f32 %v1148, %v1260
    %1262 = vmatmul.f32.gmra.mxu0 %v66
    %v1263 = vpop.f32.mrf.mxu0
    %v1264 = vadd.f32 %v1151, %v1263
    %1265 = vmatmul.f32.gmra.mxu0 %v68
    %v1266 = vpop.f32.mrf.mxu0
    %v1267 = vadd.f32 %v1154, %v1266
    %1268 = vmatmul.f32.gmra.mxu0 %v70
    %v1269 = vpop.f32.mrf.mxu0
    %v1270 = vadd.f32 %v1157, %v1269
    %1271 = vmatmul.f32.gmra.mxu0 %v72
    %v1272 = vpop.f32.mrf.mxu0
    %v1273 = vadd.f32 %v1160, %v1272
    %1274 = vmatmul.f32.gmra.mxu0 %v74
    %v1275 = vpop.f32.mrf.mxu0
    %v1276 = vadd.f32 %v1163, %v1275
    %1277 = vmatmul.f32.gmra.mxu0 %v76
    %v1278 = vpop.f32.mrf.mxu0
    %v1279 = vadd.f32 %v1166, %v1278
    %1280 = vmatmul.f32.gmra.mxu0 %v78
    %v1281 = vpop.f32.mrf.mxu0
    %v1282 = vadd.f32 %v1169, %v1281
    %1283 = vmatmul.f32.gmra.mxu0 %v80
    %v1284 = vpop.f32.mrf.mxu0
    %v1285 = vadd.f32 %v1172, %v1284
    %1286 = vmatmul.f32.gmra.mxu0 %v82
    %v1287 = vpop.f32.mrf.mxu0
    %v1288 = vadd.f32 %v1175, %v1287
    %1289 = vmatmul.f32.gmra.mxu0 %v84
    %v1290 = vpop.f32.mrf.mxu0
    %v1291 = vadd.f32 %v1178, %v1290
    %1292 = vmatmul.f32.gmra.mxu0 %v86
    %v1293 = vpop.f32.mrf.mxu0
    %v1294 = vadd.f32 %v1181, %v1293
    %1295 = vmatmul.f32.gmra.mxu0 %v88
    %v1296 = vpop.f32.mrf.mxu0
    %v1297 = vadd.f32 %v1184, %v1296
    %1298 = vmatmul.f32.gmra.mxu0 %v90
    %v1299 = vpop.f32.mrf.mxu0
    %v1300 = vadd.f32 %v1187, %v1299
    %1301 = vmatmul.f32.gmra.mxu0 %v92
    %v1302 = vpop.f32.mrf.mxu0
    %v1303 = vadd.f32 %v1190, %v1302
    %1304 = vmatmul.f32.gmra.mxu0 %v94
    %v1305 = vpop.f32.mrf.mxu0
    %v1306 = vadd.f32 %v1193, %v1305
    %1307 = vmatmul.f32.gmra.mxu0 %v96
    %v1308 = vpop.f32.mrf.mxu0
    %v1309 = vadd.f32 %v1196, %v1308
    %1310 = vmatmul.f32.gmra.mxu0 %v98
    %v1311 = vpop.f32.mrf.mxu0
    %v1312 = vadd.f32 %v1199, %v1311
    %1313 = vmatmul.f32.gmra.mxu0 %v100
    %v1314 = vpop.f32.mrf.mxu0
    %v1315 = vadd.f32 %v1202, %v1314
    %1316 = vmatmul.f32.gmra.mxu0 %v102
    %v1317 = vpop.f32.mrf.mxu0
    %v1318 = vadd.f32 %v1205, %v1317
    %1319 = vmatmul.f32.gmra.mxu0 %v104
    %v1320 = vpop.f32.mrf.mxu0
    %v1321 = vadd.f32 %v1208, %v1320
    %1322 = vmatmul.f32.gmra.mxu0 %v106
    %v1323 = vpop.f32.mrf.mxu0
    %v1324 = vadd.f32 %v1211, %v1323
    %1325 = vmatmul.f32.gmra.mxu0 %v108
    %v1326 = vpop.f32.mrf.mxu0
    %v1327 = vadd.f32 %v1214, %v1326
    %1328 = vmatmul.f32.gmra.mxu0 %v110
    %v1329 = vpop.f32.mrf.mxu0
    %v1330 = vadd.f32 %v1217, %v1329
    %1331 = vmatmul.f32.gmra.mxu0 %v112
    %v1332 = vpop.f32.mrf.mxu0
    %v1333 = vadd.f32 %v1220, %v1332
    %1334 = vmatmul.f32.gmra.mxu0 %v114
    %v1335 = vpop.f32.mrf.mxu0
    %v1336 = vadd.f32 %v1223, %v1335
    %1337 = vmatmul.f32.gmra.mxu0 %v116
    %v1338 = vpop.f32.mrf.mxu0
    %v1339 = vadd.f32 %v1226, %v1338
    %1340 = vmatmul.f32.gmra.mxu0 %v118
    %v1341 = vpop.f32.mrf.mxu0
    %v1342 = vadd.f32 %v1229, %v1341
    %1343 = vmatmul.f32.gmra.mxu0 %v120
    %v1344 = vpop.f32.mrf.mxu0
    %v1345 = vadd.f32 %v1232, %v1344
    %1346 = vmatmul.f32.gmra.mxu0 %v122
    %v1347 = vpop.f32.mrf.mxu0
    %v1348 = vadd.f32 %v1235, %v1347
    %1349 = vmatmul.f32.gmra.mxu0 %v124
    %v1350 = vpop.f32.mrf.mxu0
    %v1351 = vadd.f32 %v1238, %v1350
    %1352 = vdwg.mxu0
    %v1353 = vmax.f32 %v1032, 0.0
    %v1354 = vmax.f32 %v1258, 0.0
    %v1355 = vmax.f32 %v1035, 0.0
    %v1356 = vmax.f32 %v1261, 0.0
    %v1357 = vmax.f32 %v1038, 0.0
    %v1358 = vmax.f32 %v1264, 0.0
    %v1359 = vmax.f32 %v1041, 0.0
    %v1360 = vmax.f32 %v1267, 0.0
    %v1361 = vmax.f32 %v1044, 0.0
    %v1362 = vmax.f32 %v1270, 0.0
    %v1363 = vmax.f32 %v1047, 0.0
    %v1364 = vmax.f32 %v1273, 0.0
    %v1365 = vmax.f32 %v1050, 0.0
    %v1366 = vmax.f32 %v1276, 0.0
    %v1367 = vmax.f32 %v1053, 0.0
    %v1368 = vmax.f32 %v1279, 0.0
    %v1369 = vmax.f32 %v1056, 0.0
    %v1370 = vmax.f32 %v1282, 0.0
    %v1371 = vmax.f32 %v1059, 0.0
    %v1372 = vmax.f32 %v1285, 0.0
    %v1373 = vmax.f32 %v1062, 0.0
    %v1374 = vmax.f32 %v1288, 0.0
    %v1375 = vmax.f32 %v1065, 0.0
    %v1376 = vmax.f32 %v1291, 0.0
    %v1377 = vmax.f32 %v1068, 0.0
    %v1378 = vmax.f32 %v1294, 0.0
    %v1379 = vmax.f32 %v1071, 0.0
    %v1380 = vmax.f32 %v1297, 0.0
    %v1381 = vmax.f32 %v1074, 0.0
    %v1382 = vmax.f32 %v1300, 0.0
    %v1383 = vmax.f32 %v1077, 0.0
    %v1384 = vmax.f32 %v1303, 0.0
    %v1385 = vmax.f32 %v1080, 0.0
    %v1386 = vmax.f32 %v1306, 0.0
    %v1387 = vmax.f32 %v1083, 0.0
    %v1388 = vmax.f32 %v1309, 0.0
    %v1389 = vmax.f32 %v1086, 0.0
    %v1390 = vmax.f32 %v1312, 0.0
    %v1391 = vmax.f32 %v1089, 0.0
    %v1392 = vmax.f32 %v1315, 0.0
    %v1393 = vmax.f32 %v1092, 0.0
    %v1394 = vmax.f32 %v1318, 0.0
    %v1395 = vmax.f32 %v1095, 0.0
    %v1396 = vmax.f32 %v1321, 0.0
    %v1397 = vmax.f32 %v1098, 0.0
    %v1398 = vmax.f32 %v1324, 0.0
    %v1399 = vmax.f32 %v1101, 0.0
    %v1400 = vmax.f32 %v1327, 0.0
    %v1401 = vmax.f32 %v1104, 0.0
    %v1402 = vmax.f32 %v1330, 0.0
    %v1403 = vmax.f32 %v1107, 0.0
    %v1404 = vmax.f32 %v1333, 0.0
    %v1405 = vmax.f32 %v1110, 0.0
    %v1406 = vmax.f32 %v1336, 0.0
    %v1407 = vmax.f32 %v1113, 0.0
    %v1408 = vmax.f32 %v1339, 0.0
    %v1409 = vmax.f32 %v1116, 0.0
    %v1410 = vmax.f32 %v1342, 0.0
    %v1411 = vmax.f32 %v1119, 0.0
    %v1412 = vmax.f32 %v1345, 0.0
    %v1413 = vmax.f32 %v1122, 0.0
    %v1414 = vmax.f32 %v1348, 0.0
    %v1415 = vmax.f32 %v1125, 0.0
    %v1416 = vmax.f32 %v1351, 0.0
    %v1417 = vld [vmem:[#allocation2] sm:$0x1]
    %1419 = vset.pattern.permute.xlu0 0
    %1420 = vperm.xlu0 %1419, %v1417
    %v1421 = vpop.permute.xlu0 %1420
    %v1423 = vperm.slane %v1421, 0
    %v1425 = vperm.slane %v125, 0
    %v1426 = vperm.slane %v125, 1
    %1429 = vmatpush.msra.mxu0 %v1383
    %1430 = vmatpush.msra.mxu0 %v1381
    %1431 = vmatpush.msra.mxu0 %v1379
    %1432 = vmatpush.msra.mxu0 %v1377
    %1433 = vmatpush.msra.mxu0 %v1375
    %1434 = vmatpush.msra.mxu0 %v1373
    %1435 = vmatpush.msra.mxu0 %v1371
    %1436 = vmatpush.msra.mxu0 %v1369
    %1437 = vmatpush.msra.mxu0 %v1367
    %1438 = vmatpush.msra.mxu0 %v1365
    %1439 = vmatpush.msra.mxu0 %v1363
    %1440 = vmatpush.msra.mxu0 %v1361
    %1441 = vmatpush.msra.mxu0 %v1359
    %1442 = vmatpush.msra.mxu0 %v1357
    %1443 = vmatpush.msra.mxu0 %v1355
    %1444 = vmatpush.msra.mxu0 %v1353
    %1445 = vmatmul.f32.gmra.mxu0 %v1425
    %v1446 = vpop.f32.mrf.mxu0
    %v1447 = vadd.f32 %v1423, %v1446
    %1448 = vdwg.mxu0
    %1449 = vmatpush.msra.mxu0 %v1415
    %1450 = vmatpush.msra.mxu0 %v1413
    %1451 = vmatpush.msra.mxu0 %v1411
    %1452 = vmatpush.msra.mxu0 %v1409
    %1453 = vmatpush.msra.mxu0 %v1407
    %1454 = vmatpush.msra.mxu0 %v1405
    %1455 = vmatpush.msra.mxu0 %v1403
    %1456 = vmatpush.msra.mxu0 %v1401
    %1457 = vmatpush.msra.mxu0 %v1399
    %1458 = vmatpush.msra.mxu0 %v1397
    %1459 = vmatpush.msra.mxu0 %v1395
    %1460 = vmatpush.msra.mxu0 %v1393
    %1461 = vmatpush.msra.mxu0 %v1391
    %1462 = vmatpush.msra.mxu0 %v1389
    %1463 = vmatpush.msra.mxu0 %v1387
    %1464 = vmatpush.msra.mxu0 %v1385
    %1465 = vmatmul.f32.gmra.mxu0 %v1426
    %v1466 = vpop.f32.mrf.mxu0
    %v1467 = vadd.f32 %v1447, %v1466
    %1468 = vdwg.mxu0
    %1469 = vmatpush.msra.mxu0 %v1384
    %1470 = vmatpush.msra.mxu0 %v1382
    %1471 = vmatpush.msra.mxu0 %v1380
    %1472 = vmatpush.msra.mxu0 %v1378
    %1473 = vmatpush.msra.mxu0 %v1376
    %1474 = vmatpush.msra.mxu0 %v1374
    %1475 = vmatpush.msra.mxu0 %v1372
    %1476 = vmatpush.msra.mxu0 %v1370
    %1477 = vmatpush.msra.mxu0 %v1368
    %1478 = vmatpush.msra.mxu0 %v1366
    %1479 = vmatpush.msra.mxu0 %v1364
    %1480 = vmatpush.msra.mxu0 %v1362
    %1481 = vmatpush.msra.mxu0 %v1360
    %1482 = vmatpush.msra.mxu0 %v1358
    %1483 = vmatpush.msra.mxu0 %v1356
    %1484 = vmatpush.msra.mxu0 %v1354
    %1485 = vmatmul.f32.gmra.mxu0 %v1425
    %v1486 = vpop.f32.mrf.mxu0
    %v1487 = vadd.f32 %v1423, %v1486
    %1488 = vdwg.mxu0
    %1489 = vmatpush.msra.mxu0 %v1416
    %1490 = vmatpush.msra.mxu0 %v1414
    %1491 = vmatpush.msra.mxu0 %v1412
    %1492 = vmatpush.msra.mxu0 %v1410
    %1493 = vmatpush.msra.mxu0 %v1408
    %1494 = vmatpush.msra.mxu0 %v1406
    %1495 = vmatpush.msra.mxu0 %v1404
    %1496 = vmatpush.msra.mxu0 %v1402
    %1497 = vmatpush.msra.mxu0 %v1400
    %1498 = vmatpush.msra.mxu0 %v1398
    %1499 = vmatpush.msra.mxu0 %v1396
    %1500 = vmatpush.msra.mxu0 %v1394
    %1501 = vmatpush.msra.mxu0 %v1392
    %1502 = vmatpush.msra.mxu0 %v1390
    %1503 = vmatpush.msra.mxu0 %v1388
    %1504 = vmatpush.msra.mxu0 %v1386
    %1505 = vmatmul.f32.gmra.mxu0 %v1426
    %v1506 = vpop.f32.mrf.mxu0
    %v1507 = vadd.f32 %v1487, %v1506
    %1508 = vdwg.mxu0
    %v1511 = vrot.slane %v1507, 7
    %vm1512 = vcmask 1040384
    %v1513 = vsel %vm1512, %v1467, %v1511
    %v1515 = vlaneseq
    %vm1516 = vcmp.ge.s32.totalorder %v1515, 0
    %vm1517 = vcmp.lt.s32.totalorder %v1515, 256
    %vm1518 = vmand %vm1516, %vm1517
    %1519 = vst.msk [vmem:[#allocation3] sm:$0x3] %vm1518, %v1513
    // Predicated region
    $region30: #{critic_forward.1} parent=1 // pred_check
      _
    $region31: #{critic_forward.1} parent=1 // pred_check_branch
      %1521 = sbr.rel (0) target = $region33
    $region32: #{critic_forward.1} parent=1 // pred_region
      %1523 = vsyncadd [#allocation4], 0
      %s1525 = sshll.u32 [#allocation3], 4
      %s1526 = int_to_ptr.vmem [resolvable:$true] %s1525
      %s1527 = sshll.u32 %s7, 4
      %s1528 = int_to_ptr.hbm [resolvable:$true] %s1527
      %1530 = dma.vmem_to_hbm [thread:$0]  %s1526, 32, %s1528, [#allocation4]
    $region33: #{critic_forward.1} parent=1 // pred_fallthru
      _
    // Predicated region
    $region34: #{critic_forward.1} parent=1 // pred_check
      _
    $region35: #{critic_forward.1} parent=1 // pred_check_branch
      %1532 = sbr.rel (0) target = $region37
    $region36: #{critic_forward.1} parent=1 // pred_region
      %1534 = dma.done [#allocation4], 32
    $region37: #{critic_forward.1} parent=1 // pred_fallthru
      _
    %1535 = vsyncpa [#allocation4], 1

</llo_original>
